<compile_context>
chip_gen: v7x
topology: tpu7x:2x2x1
jax: 0.10.0
libtpu: 0.0.40
codegen_flags: <defaults>
</compile_context>

<pallas_src>
import functools

import jax
import jax.numpy as jnp
import numpy as np
from jax import lax
from jax.experimental import pallas as pl
from jax.experimental.pallas import tpu as pltpu

EPS = 1e-5


def _round_up(x, m):
    return (x + m - 1) // m * m


# ---------------------------------------------------------------------------
# Pallas kernels: out[Cout, tile_m] = relu( W[Cout,K] @ P[K,tile_m] + bias (+ res) )
# (single K=9*Cin MXU contraction; f32 accumulation; f32 epilogue)
# ---------------------------------------------------------------------------
def _conv_bn_relu_kernel(w_ref, p_ref, b_ref, o_ref):
    acc = jnp.dot(w_ref[...], p_ref[...], preferred_element_type=jnp.float32)
    o_ref[...] = jnp.maximum(acc + b_ref[...], 0.0).astype(o_ref.dtype)


def _conv_bn_res_relu_kernel(w_ref, p_ref, b_ref, r_ref, o_ref):
    acc = jnp.dot(w_ref[...], p_ref[...], preferred_element_type=jnp.float32)
    o_ref[...] = jnp.maximum(acc + b_ref[...] + r_ref[...], 0.0).astype(o_ref.dtype)


# ---------------------------------------------------------------------------
# 3x3 conv (pad=1, stride s, no bias) + folded-BN + optional residual + ReLU
# ---------------------------------------------------------------------------
def conv3x3_bn_relu(x_nhwc, w_oihw, scale, bias, residual_nhwc, stride,
                    tile_m=256):
    N, H, W, Cin = x_nhwc.shape
    Cout = w_oihw.shape[0]
    Ho = (H + 2 - 3) // stride + 1
    Wo = (W + 2 - 3) // stride + 1
    M = N * Ho * Wo
    K = 9 * Cin

    # Fold the BN scale into the conv weights (one-time O(9*Cin*Cout) op).
    w_folded = w_oihw * scale[:, None, None, None]                  # (Cout,Cin,3,3)
    # (Cout,Cin,kh,kw) -> (Cout,kh,kw,Cin) -> (Cout, K); K order = (tap, Cin)
    w_t = jnp.transpose(w_folded, (0, 2, 3, 1)).reshape(Cout, K)
    w_t = w_t.astype(jnp.bfloat16)

    # im2col glue (pure data movement), transposed to (K, M) so the large M
    # axis lands on the lane dimension inside the kernel.
    x_pad = jnp.pad(x_nhwc, ((0, 0), (1, 1), (1, 1), (0, 0)))
    cols = []
    for kh in range(3):
        for kw in range(3):
            p = x_pad[:,
                      kh: kh + (Ho - 1) * stride + 1: stride,
                      kw: kw + (Wo - 1) * stride + 1: stride, :]
            cols.append(p.reshape(M, Cin))
    patches = jnp.concatenate(cols, axis=-1)                        # (M, K)
    patches_t = patches.T.astype(jnp.bfloat16)                      # (K, M)

    # Tile over M (pad M up to a multiple of the tile; cropped afterwards).
    tm = min(tile_m, _round_up(M, 128))
    M_pad = _round_up(M, tm)
    if M_pad != M:
        patches_t = jnp.pad(patches_t, ((0, 0), (0, M_pad - M)))

    bias_col = bias.reshape(Cout, 1).astype(jnp.float32)

    grid = (M_pad // tm,)
    w_spec = pl.BlockSpec((Cout, K), lambda i: (0, 0))   # constant -> stays resident
    p_spec = pl.BlockSpec((K, tm), lambda i: (0, i))
    b_spec = pl.BlockSpec((Cout, 1), lambda i: (0, 0))
    o_spec = pl.BlockSpec((Cout, tm), lambda i: (0, i))
    out_shape = jax.ShapeDtypeStruct((Cout, M_pad), jnp.float32)
    cparams = pltpu.CompilerParams(dimension_semantics=("parallel",))

    if residual_nhwc is None:
        out_t = pl.pallas_call(
            _conv_bn_relu_kernel,
            grid=grid,
            in_specs=[w_spec, p_spec, b_spec],
            out_specs=o_spec,
            out_shape=out_shape,
            compiler_params=cparams,
        )(w_t, patches_t, bias_col)
    else:
        res_t = residual_nhwc.reshape(M, Cout).T.astype(jnp.float32)  # (Cout, M)
        if M_pad != M:
            res_t = jnp.pad(res_t, ((0, 0), (0, M_pad - M)))
        r_spec = pl.BlockSpec((Cout, tm), lambda i: (0, i))
        out_t = pl.pallas_call(
            _conv_bn_res_relu_kernel,
            grid=grid,
            in_specs=[w_spec, p_spec, b_spec, r_spec],
            out_specs=o_spec,
            out_shape=out_shape,
            compiler_params=cparams,
        )(w_t, patches_t, bias_col, res_t)

    return out_t[:, :M].T.reshape(N, Ho, Wo, Cout)


# ---------------------------------------------------------------------------
# BasicBlock forward
# ---------------------------------------------------------------------------
def _fold_bn(gamma, beta, mean, var):
    scale = gamma / jnp.sqrt(var + EPS)
    bias = beta - mean * scale
    return scale, bias


@functools.partial(jax.jit, static_argnames=("stride", "option"))
def basic_block_forward(x_nchw, params, stride, option='A'):
    """Faithful BasicBlock.forward (inference-mode BN).  x_nchw: (N,C,H,W) f32."""
    x = jnp.transpose(x_nchw, (0, 2, 3, 1))      # -> NHWC
    in_planes = x.shape[-1]
    planes = params['conv1_w'].shape[0]

    s1, b1 = _fold_bn(params['bn1_gamma'], params['bn1_beta'],
                      params['bn1_mean'], params['bn1_var'])
    s2, b2 = _fold_bn(params['bn2_gamma'], params['bn2_beta'],
                      params['bn2_mean'], params['bn2_var'])

    # out = relu(bn1(conv1(x)))   -- no residual, no zeros materialized
    out1 = conv3x3_bn_relu(x, params['conv1_w'], s1, b1, None, stride)

    # shortcut
    if stride != 1 or in_planes != planes:
        if option == 'A':
            sc = x[:, ::2, ::2, :]
            pad = planes // 4
            sc = jnp.pad(sc, ((0, 0), (0, 0), (0, 0), (pad, pad)))
        else:
            raise NotImplementedError  # TODO(synk): option 'B' (1x1-conv shortcut) not exercised by this model config
    else:
        sc = x

    # out = relu(bn2(conv2(out)) + shortcut(x))
    out2 = conv3x3_bn_relu(out1, params['conv2_w'], s2, b2, sc, 1)

    return jnp.transpose(out2, (0, 3, 1, 2))     # -> NCHW


# ---------------------------------------------------------------------------
# Pure-JAX f32 reference (for correctness check)
# ---------------------------------------------------------------------------
def _conv3x3_ref(x_nhwc, w_oihw, stride):
    w = jnp.transpose(w_oihw, (2, 3, 1, 0))  # HWIO
    return lax.conv_general_dilated(
        x_nhwc, w, window_strides=(stride, stride), padding=((1, 1), (1, 1)),
        dimension_numbers=('NHWC', 'HWIO', 'NHWC'),
        preferred_element_type=jnp.float32)


def basic_block_reference(x_nchw, params, stride, option='A'):
    x = jnp.transpose(x_nchw, (0, 2, 3, 1))
    in_planes = x.shape[-1]
    planes = params['conv1_w'].shape[0]
    s1, b1 = _fold_bn(params['bn1_gamma'], params['bn1_beta'],
                      params['bn1_mean'], params['bn1_var'])
    s2, b2 = _fold_bn(params['bn2_gamma'], params['bn2_beta'],
                      params['bn2_mean'], params['bn2_var'])
    out = jnp.maximum(_conv3x3_ref(x, params['conv1_w'], stride) * s1 + b1, 0.0)
    out = _conv3x3_ref(out, params['conv2_w'], 1) * s2 + b2
    if stride != 1 or in_planes != planes:
        sc = x[:, ::2, ::2, :]
        pad = planes // 4
        sc = jnp.pad(sc, ((0, 0), (0, 0), (0, 0), (pad, pad)))
    else:
        sc = x
    out = jnp.maximum(out + sc, 0.0)
    return jnp.transpose(out, (0, 3, 1, 2))


# ---------------------------------------------------------------------------
# Deterministic parameter init
# ---------------------------------------------------------------------------
def make_params(key, in_planes, planes):
    ks = jax.random.split(key, 10)
    return {
        'conv1_w': jax.random.normal(ks[0], (planes, in_planes, 3, 3), jnp.float32) * 0.1,
        'conv2_w': jax.random.normal(ks[1], (planes, planes, 3, 3), jnp.float32) * 0.1,
        'bn1_gamma': 1.0 + 0.1 * jax.random.normal(ks[2], (planes,), jnp.float32),
        'bn1_beta': 0.1 * jax.random.normal(ks[3], (planes,), jnp.float32),
        'bn1_mean': 0.05 * jax.random.normal(ks[4], (planes,), jnp.float32),
        'bn1_var': 0.5 + jax.random.uniform(ks[5], (planes,), jnp.float32),
        'bn2_gamma': 1.0 + 0.1 * jax.random.normal(ks[6], (planes,), jnp.float32),
        'bn2_beta': 0.1 * jax.random.normal(ks[7], (planes,), jnp.float32),
        'bn2_mean': 0.05 * jax.random.normal(ks[8], (planes,), jnp.float32),
        'bn2_var': 0.5 + jax.random.uniform(ks[9], (planes,), jnp.float32),
    }


if __name__ == "__main__":
    key = jax.random.PRNGKey(0)
    k_x1, k_p1, k_x2, k_p2 = jax.random.split(key, 4)

    # bf16 inputs/weights with f32 accumulation -> tolerance sized for bf16 rounding.
    RTOL, ATOL = 2e-2, 3e-2

    # Case 1: identity shortcut (stride=1, in_planes == planes); M=512 -> 2 grid tiles
    N, C, H, W = 2, 16, 16, 16
    x1 = jax.random.normal(k_x1, (N, C, H, W), jnp.float32)
    params1 = make_params(k_p1, in_planes=C, planes=C)
    out1 = jax.block_until_ready(basic_block_forward(x1, params1, stride=1))
    ref1 = basic_block_reference(x1, params1, stride=1)
    assert out1.shape == (N, C, H, W)
    np.testing.assert_allclose(np.asarray(out1), np.asarray(ref1),
                               rtol=RTOL, atol=ATOL)

    # Case 2: option 'A' shortcut (stride=2, planes = 2 * in_planes)
    in_planes, planes = 16, 32
    x2 = jax.random.normal(k_x2, (N, in_planes, H, W), jnp.float32)
    params2 = make_params(k_p2, in_planes=in_planes, planes=planes)
    out2 = jax.block_until_ready(basic_block_forward(x2, params2, stride=2))
    ref2 = basic_block_reference(x2, params2, stride=2)
    assert out2.shape == (N, planes, H // 2, W // 2)
    np.testing.assert_allclose(np.asarray(out2), np.asarray(ref2),
                               rtol=RTOL, atol=ATOL)

    print("KERNEL_OK")
</pallas_src>

<mosaic_0001>
module attributes {stable_mosaic.version = 11 : i64} {
  func.func @_conv_bn_relu_kernel(%arg0: i32, %arg1: memref<16x144xbf16, #tpu.memory_space<vmem>>, %arg2: memref<144x256xbf16, #tpu.memory_space<vmem>>, %arg3: memref<16x1xf32, #tpu.memory_space<vmem>>, %arg4: memref<16x256xf32, #tpu.memory_space<vmem>>) attributes {dimension_semantics = [#tpu.dimension_semantics<parallel>], iteration_bounds = array<i64: 2>, scalar_prefetch = 0 : i64, scratch_operands = 0 : i64, tpu.core_type = #tpu.core_type<tc>, window_params = [{pipeline_mode = #tpu.pipeline_mode<synchronous>, transform_indices = @transform_0, window_bounds = array<i64: 16, 144>}, {transform_indices = @transform_1, window_bounds = array<i64: 144, 256>}, {pipeline_mode = #tpu.pipeline_mode<synchronous>, transform_indices = @transform_2, window_bounds = array<i64: 16, 1>}, {transform_indices = @transform_3, window_bounds = array<i64: 16, 256>}]} {
    %c0 = arith.constant 0 : index
    %c0_0 = arith.constant 0 : index
    %0 = vector.load %arg1[%c0, %c0_0] : memref<16x144xbf16, #tpu.memory_space<vmem>>, vector<16x144xbf16>
    %c0_1 = arith.constant 0 : index
    %c0_2 = arith.constant 0 : index
    %1 = vector.load %arg2[%c0_1, %c0_2] : memref<144x256xbf16, #tpu.memory_space<vmem>>, vector<144x256xbf16>
    %cst = arith.constant dense<0.000000e+00> : vector<16x256xf32>
    %2 = tpu.matmul %0, %1, %cst {dimension_numbers = #tpu.dot_dimension_numbers<[1], [0], [0], [1], [0, 0, 1, 1], [], []>} : vector<16x144xbf16>, vector<144x256xbf16>, vector<16x256xf32> -> vector<16x256xf32>
    %c0_3 = arith.constant 0 : index
    %c0_4 = arith.constant 0 : index
    %3 = vector.load %arg3[%c0_3, %c0_4] : memref<16x1xf32, #tpu.memory_space<vmem>>, vector<16x1xf32>
    %4 = vector.broadcast %3 : vector<16x1xf32> to vector<16x256xf32>
    %5 = arith.addf %2, %4 : vector<16x256xf32>
    %cst_5 = arith.constant 0.000000e+00 : f32
    %6 = vector.broadcast %cst_5 : f32 to vector<16x256xf32>
    %7 = arith.maximumf %5, %6 : vector<16x256xf32>
    %c0_6 = arith.constant 0 : index
    %c0_7 = arith.constant 0 : index
    %8 = vector.load %arg4[%c0_6, %c0_7] : memref<16x256xf32, #tpu.memory_space<vmem>>, vector<16x256xf32>
    tpu.vector_store %arg4[%c0_6, %c0_7], %7 {strides = array<i32>} : memref<16x256xf32, #tpu.memory_space<vmem>>, vector<16x256xf32>,
    return
  }
  func.func @transform_0(%arg0: i32) -> (i32, i32) {
    %c0_i32 = arith.constant 0 : i32
    %c0_i32_0 = arith.constant 0 : i32
    %c0_i32_1 = arith.constant 0 : i32
    return %c0_i32, %c0_i32_0 : i32, i32
  }
  func.func @transform_1(%arg0: i32) -> (i32, i32) {
    %c0_i32 = arith.constant 0 : i32
    %c0_i32_0 = arith.constant 0 : i32
    return %c0_i32, %arg0 : i32, i32
  }
  func.func @transform_2(%arg0: i32) -> (i32, i32) {
    %c0_i32 = arith.constant 0 : i32
    %c0_i32_0 = arith.constant 0 : i32
    %c0_i32_1 = arith.constant 0 : i32
    return %c0_i32, %c0_i32_0 : i32, i32
  }
  func.func @transform_3(%arg0: i32) -> (i32, i32) {
    %c0_i32 = arith.constant 0 : i32
    %c0_i32_0 = arith.constant 0 : i32
    return %c0_i32, %arg0 : i32, i32
  }
}

module attributes {stable_mosaic.version = 11 : i64} {
  func.func @_conv_bn_res_relu_kernel(%arg0: i32, %arg1: memref<16x144xbf16, #tpu.memory_space<vmem>>, %arg2: memref<144x256xbf16, #tpu.memory_space<vmem>>, %arg3: memref<16x1xf32, #tpu.memory_space<vmem>>, %arg4: memref<16x256xf32, #tpu.memory_space<vmem>>, %arg5: memref<16x256xf32, #tpu.memory_space<vmem>>) attributes {dimension_semantics = [#tpu.dimension_semantics<parallel>], iteration_bounds = array<i64: 2>, scalar_prefetch = 0 : i64, scratch_operands = 0 : i64, tpu.core_type = #tpu.core_type<tc>, window_params = [{pipeline_mode = #tpu.pipeline_mode<synchronous>, transform_indices = @transform_0, window_bounds = array<i64: 16, 144>}, {transform_indices = @transform_1, window_bounds = array<i64: 144, 256>}, {pipeline_mode = #tpu.pipeline_mode<synchronous>, transform_indices = @transform_2, window_bounds = array<i64: 16, 1>}, {transform_indices = @transform_3, window_bounds = array<i64: 16, 256>}, {transform_indices = @transform_4, window_bounds = array<i64: 16, 256>}]} {
    %c0 = arith.constant 0 : index
    %c0_0 = arith.constant 0 : index
    %0 = vector.load %arg1[%c0, %c0_0] : memref<16x144xbf16, #tpu.memory_space<vmem>>, vector<16x144xbf16>
    %c0_1 = arith.constant 0 : index
    %c0_2 = arith.constant 0 : index
    %1 = vector.load %arg2[%c0_1, %c0_2] : memref<144x256xbf16, #tpu.memory_space<vmem>>, vector<144x256xbf16>
    %cst = arith.constant dense<0.000000e+00> : vector<16x256xf32>
    %2 = tpu.matmul %0, %1, %cst {dimension_numbers = #tpu.dot_dimension_numbers<[1], [0], [0], [1], [0, 0, 1, 1], [], []>} : vector<16x144xbf16>, vector<144x256xbf16>, vector<16x256xf32> -> vector<16x256xf32>
    %c0_3 = arith.constant 0 : index
    %c0_4 = arith.constant 0 : index
    %3 = vector.load %arg3[%c0_3, %c0_4] : memref<16x1xf32, #tpu.memory_space<vmem>>, vector<16x1xf32>
    %4 = vector.broadcast %3 : vector<16x1xf32> to vector<16x256xf32>
    %5 = arith.addf %2, %4 : vector<16x256xf32>
    %c0_5 = arith.constant 0 : index
    %c0_6 = arith.constant 0 : index
    %6 = vector.load %arg4[%c0_5, %c0_6] : memref<16x256xf32, #tpu.memory_space<vmem>>, vector<16x256xf32>
    %7 = arith.addf %5, %6 : vector<16x256xf32>
    %cst_7 = arith.constant 0.000000e+00 : f32
    %8 = vector.broadcast %cst_7 : f32 to vector<16x256xf32>
    %9 = arith.maximumf %7, %8 : vector<16x256xf32>
    %c0_8 = arith.constant 0 : index
    %c0_9 = arith.constant 0 : index
    %10 = vector.load %arg5[%c0_8, %c0_9] : memref<16x256xf32, #tpu.memory_space<vmem>>, vector<16x256xf32>
    tpu.vector_store %arg5[%c0_8, %c0_9], %9 {strides = array<i32>} : memref<16x256xf32, #tpu.memory_space<vmem>>, vector<16x256xf32>,
    return
  }
  func.func @transform_0(%arg0: i32) -> (i32, i32) {
    %c0_i32 = arith.constant 0 : i32
    %c0_i32_0 = arith.constant 0 : i32
    %c0_i32_1 = arith.constant 0 : i32
    return %c0_i32, %c0_i32_0 : i32, i32
  }
  func.func @transform_1(%arg0: i32) -> (i32, i32) {
    %c0_i32 = arith.constant 0 : i32
    %c0_i32_0 = arith.constant 0 : i32
    return %c0_i32, %arg0 : i32, i32
  }
  func.func @transform_2(%arg0: i32) -> (i32, i32) {
    %c0_i32 = arith.constant 0 : i32
    %c0_i32_0 = arith.constant 0 : i32
    %c0_i32_1 = arith.constant 0 : i32
    return %c0_i32, %c0_i32_0 : i32, i32
  }
  func.func @transform_3(%arg0: i32) -> (i32, i32) {
    %c0_i32 = arith.constant 0 : i32
    %c0_i32_0 = arith.constant 0 : i32
    return %c0_i32, %arg0 : i32, i32
  }
  func.func @transform_4(%arg0: i32) -> (i32, i32) {
    %c0_i32 = arith.constant 0 : i32
    %c0_i32_0 = arith.constant 0 : i32
    return %c0_i32, %arg0 : i32, i32
  }
}

</mosaic_0001>

<llo_original>
// kernel: basic_block_forward.2
$region0: #{basic_block_forward.2}
  #allocation0 [shape = 'u32[]', space=smem, size = 0x4, offset = 0x4, fixed_abs, tag = 'smem constant byte address 0x4 - core index']
  #allocation1 [shape = 'u32[144,128]{1,0:T(1,128)}', space=vmem, size = 0x12000, scoped, tag = 'internal scratch']
  %s0 = inlined_call_operand.vmem [shape: bf16[16,144], index: 0, kind: input, shape index: {}]
  %s1 = inlined_call_operand.vmem [shape: bf16[144,512], index: 1, kind: input, shape index: {}]
  %s2 = inlined_call_operand.vmem [shape: f32[16,1], index: 2, kind: input, shape index: {}]
  %s3 = inlined_call_operand.vmem [shape: f32[16,512], index: 3, kind: output, shape index: {}]
  %s4 = sld [smem:[#allocation0]]
  $region102: #{basic_block_forward.2} parent=0
    _
  %s6 = ssub.s32 1, %s4
  %s7 = scalar_select 0, %s6, %s4
  $region1: #{basic_block_forward.2} parent=0
    #allocation2 [shape = 'u8[147456]{0}', space=vmem, size = 0x24000, scoped, tag = 'input window, operand 1']
    #allocation3 [shape = 'u8[32768]{0}', space=vmem, size = 0x8000, scoped, tag = 'output window, operand 0']
    loop: start=0, step=1, limit=4
    $region2: #{basic_block_forward.2} parent=1 // loop_pre_header
      _
    $region3: #{basic_block_forward.2} parent=1 // loop_header
      %s9 = sphi 0, %s13
      %p10 = scmp.ge.s32.totalorder %s9, 4
      %s17 = sphi 0, %s17
      %s19 = sphi 0, %s17
      %s20 = sphi 0, %s19
      %s34 = sphi 0, %s20
      %s40 = sphi 0, %s42
      %s43 = sphi 0, %s40
      %s44 = sphi 0, %s43
      %s60 = sphi 0, %s44
      %s64 = sphi 0, %s64
      %s66 = sphi 0, %s64
      %s67 = sphi 0, %s66
      %s81 = sphi 0, %s67
      %s87 = sphi 0, %s89
      %s90 = sphi 0, %s87
      %s91 = sphi 0, %s90
      %s107 = sphi 0, %s91
    $region4: #{basic_block_forward.2} parent=1 // loop_header_branch
      %12 = sbr.rel (%p10) target = $region8
    $region5: #{basic_block_forward.2} parent=1 // loop_body
      %s14 = ssub.s32 %s9, 1
      %s15 = ssub.s32 %s9, 2
      %s16 = sadd.s32 %s9, 1
      %s18 = sadd.s32 %s17, 1
      %p21 = scmp.eq.s32.totalorder %s9, 1
      %p22 = scmp.ne.s32.totalorder %s17, %s19
      %p23 = scmp.eq.s32.totalorder %s9, 0
      %p24 = por %p22, %p23
      %p25 = scmp.ne.s32.totalorder %s17, %s19
      %p26 = scmp.eq.s32.totalorder %s14, 1
      %p27 = por %p25, %p26
      %p28 = scmp.ne.s32.totalorder %s19, %s20
      %p29 = scmp.eq.s32.totalorder %s14, 0
      %p30 = por %p28, %p29
      %p31 = scmp.ne.s32.totalorder %s19, %s20
      %p32 = scmp.eq.s32.totalorder %s15, 1
      %p33 = por %p31, %p32
      %p35 = scmp.ne.s32.totalorder %s20, %s34
      %p36 = scmp.eq.s32.totalorder %s15, 0
      %p37 = por %p35, %p36
      %s38 = ssub.s32 %s9, %s16
      %p39 = scmp.eq.s32.totalorder %s38, 0
      %s41 = sadd.s32 %s40, 1
      %s42 = scalar_select %p39, %s40, %s41
      %p45 = pneg %p39
      %p46 = scmp.eq.s32.totalorder %s9, 1
      %p47 = por %p45, %p46
      %p48 = scmp.ne.s32.totalorder %s40, %s43
      %p49 = scmp.eq.s32.totalorder %s9, 0
      %p50 = por %p48, %p49
      %p51 = scmp.ne.s32.totalorder %s40, %s43
      %p52 = scmp.eq.s32.totalorder %s14, 1
      %p53 = por %p51, %p52
      %p54 = scmp.ne.s32.totalorder %s43, %s44
      %p55 = scmp.eq.s32.totalorder %s14, 0
      %p56 = por %p54, %p55
      %p57 = scmp.ne.s32.totalorder %s43, %s44
      %p58 = scmp.eq.s32.totalorder %s15, 1
      %p59 = por %p57, %p58
      %p61 = scmp.ne.s32.totalorder %s44, %s60
      %p62 = scmp.eq.s32.totalorder %s15, 0
      %p63 = por %p61, %p62
      %s65 = sadd.s32 %s64, 1
      %p68 = scmp.eq.s32.totalorder %s9, 1
      %p69 = scmp.ne.s32.totalorder %s64, %s66
      %p70 = scmp.eq.s32.totalorder %s9, 0
      %p71 = por %p69, %p70
      %p72 = scmp.ne.s32.totalorder %s64, %s66
      %p73 = scmp.eq.s32.totalorder %s14, 1
      %p74 = por %p72, %p73
      %p75 = scmp.ne.s32.totalorder %s66, %s67
      %p76 = scmp.eq.s32.totalorder %s14, 0
      %p77 = por %p75, %p76
      %p78 = scmp.ne.s32.totalorder %s66, %s67
      %p79 = scmp.eq.s32.totalorder %s15, 1
      %p80 = por %p78, %p79
      %p82 = scmp.ne.s32.totalorder %s67, %s81
      %p83 = scmp.eq.s32.totalorder %s15, 0
      %p84 = por %p82, %p83
      %s85 = ssub.s32 %s9, %s16
      %p86 = scmp.eq.s32.totalorder %s85, 0
      %s88 = sadd.s32 %s87, 1
      %s89 = scalar_select %p86, %s87, %s88
      %p92 = pneg %p86
      %p93 = scmp.eq.s32.totalorder %s9, 1
      %p94 = por %p92, %p93
      %p95 = scmp.ne.s32.totalorder %s87, %s90
      %p96 = scmp.eq.s32.totalorder %s9, 0
      %p97 = por %p95, %p96
      %p98 = scmp.ne.s32.totalorder %s87, %s90
      %p99 = scmp.eq.s32.totalorder %s14, 1
      %p100 = por %p98, %p99
      %p101 = scmp.ne.s32.totalorder %s90, %s91
      %p102 = scmp.eq.s32.totalorder %s14, 0
      %p103 = por %p101, %p102
      %p104 = scmp.ne.s32.totalorder %s90, %s91
      %p105 = scmp.eq.s32.totalorder %s15, 1
      %p106 = por %p104, %p105
      %p108 = scmp.ne.s32.totalorder %s91, %s107
      %p109 = scmp.eq.s32.totalorder %s15, 0
      %p110 = por %p108, %p109
      %p111 = scmp.le.s32.totalorder 1, %s9
      %p112 = scmp.lt.s32.totalorder %s9, 3
      %p113 = pnand %p111, %p112
      %p114 = pneg %p113
      // Predicated region
      $region9: #{basic_block_forward.2} parent=5 // pred_check
        _
      $region10: #{basic_block_forward.2} parent=5 // pred_check_branch
        %116 = sbr.rel (%p113) target = $region12
      $region11: #{basic_block_forward.2} parent=5 // pred_region
        %s117 = ssub.s32 %s9, 1
        // Predicated region
        $region13: #{basic_block_forward.2} parent=11 // pred_check
          %p118 = pneg %p30
        $region14: #{basic_block_forward.2} parent=11 // pred_check_branch
          %120 = sbr.rel (%p118) target = $region16
        $region15: #{basic_block_forward.2} parent=11 // pred_region
          _
        $region16: #{basic_block_forward.2} parent=11 // pred_fallthru
          _
        // Predicated region
        $region17: #{basic_block_forward.2} parent=11 // pred_check
          %p121 = pneg %p77
        $region18: #{basic_block_forward.2} parent=11 // pred_check_branch
          %123 = sbr.rel (%p121) target = $region20
        $region19: #{basic_block_forward.2} parent=11 // pred_region
          _
        $region20: #{basic_block_forward.2} parent=11 // pred_fallthru
          _
      $region12: #{basic_block_forward.2} parent=5 // pred_fallthru
        _
      %p124 = scmp.lt.s32.totalorder %s9, 2
      // Predicated region
      $region21: #{basic_block_forward.2} parent=5 // pred_check
        %p125 = pneg %p124
      $region22: #{basic_block_forward.2} parent=5 // pred_check_branch
        %127 = sbr.rel (%p125) target = $region24
      $region23: #{basic_block_forward.2} parent=5 // pred_region
        // Predicated region
        $region25: #{basic_block_forward.2} parent=23 // pred_check
          %p128 = pneg %p50
        $region26: #{basic_block_forward.2} parent=23 // pred_check_branch
          %130 = sbr.rel (%p128) target = $region28
        $region27: #{basic_block_forward.2} parent=23 // pred_region
          %s131 = sand.u32 %s40, 1
          %s132 = sand.u32 %s40, 1
          %s133 = smul.addr %s132, 144
          %s134 = scalar_lea.vmem [#allocation2], %s133
          %s135 = smul.u32 2, %s9
          %s136 = smul.addr %s135, 4
          %s137 = scalar_lea.vmem %s1, %s136
          // Predicated region
          $region29: #{basic_block_forward.2} parent=27 // pred_check
            _
          $region30: #{basic_block_forward.2} parent=27 // pred_check_branch
            %139 = sbr.rel (0) target = $region32
          $region31: #{basic_block_forward.2} parent=27 // pred_region
            // Predicated region
            $region33: #{basic_block_forward.2} parent=31 // pred_check
              _
            $region34: #{basic_block_forward.2} parent=31 // pred_check_branch
              %141 = sbr.rel (0) target = $region36
            $region35: #{basic_block_forward.2} parent=31 // pred_region
              // Predicated region
              $region48: #{basic_block_forward.2} parent=35 // pred_check
                _
              $region49: #{basic_block_forward.2} parent=35 // pred_check_branch
                %190 = sbr.rel (0) target = $region51
              $region50: #{basic_block_forward.2} parent=35 // pred_region
                loop: start=0, step=1, limit=1
                $region52: #{basic_block_forward.2} parent=50 // loop_pre_header
                  _
                $region53: #{basic_block_forward.2} parent=50 // loop_header
                  %s192 = sphi 0, %s196
                  %p193 = scmp.ge.s32.totalorder %s192, 1
                  %s197 = sphi %s137, %s137
                  %s198 = sphi %s134, %s134
                $region54: #{basic_block_forward.2} parent=50 // loop_header_branch
                  %195 = sbr.rel (%p193) target = $region58
                $region55: #{basic_block_forward.2} parent=50 // loop_body
                  %v199 = vld [vmem:[%s197] sm:$0xff]
                  %200 = vst [vmem:[%s198] sm:$0xff] %v199
                  %v201 = vld [vmem:[%s197 + $0x10] sm:$0xff]
                  %202 = vst [vmem:[%s198 + $0x8] sm:$0xff] %v201
                  %v203 = vld [vmem:[%s197 + $0x20] sm:$0xff]
                  %204 = vst [vmem:[%s198 + $0x10] sm:$0xff] %v203
                  %v205 = vld [vmem:[%s197 + $0x30] sm:$0xff]
                  %206 = vst [vmem:[%s198 + $0x18] sm:$0xff] %v205
                  %v207 = vld [vmem:[%s197 + $0x40] sm:$0xff]
                  %208 = vst [vmem:[%s198 + $0x20] sm:$0xff] %v207
                  %v209 = vld [vmem:[%s197 + $0x50] sm:$0xff]
                  %210 = vst [vmem:[%s198 + $0x28] sm:$0xff] %v209
                  %v211 = vld [vmem:[%s197 + $0x60] sm:$0xff]
                  %212 = vst [vmem:[%s198 + $0x30] sm:$0xff] %v211
                  %v213 = vld [vmem:[%s197 + $0x70] sm:$0xff]
                  %214 = vst [vmem:[%s198 + $0x38] sm:$0xff] %v213
                  %v215 = vld [vmem:[%s197 + $0x80] sm:$0xff]
                  %216 = vst [vmem:[%s198 + $0x40] sm:$0xff] %v215
                  %v217 = vld [vmem:[%s197 + $0x90] sm:$0xff]
                  %218 = vst [vmem:[%s198 + $0x48] sm:$0xff] %v217
                  %v219 = vld [vmem:[%s197 + $0xa0] sm:$0xff]
                  %220 = vst [vmem:[%s198 + $0x50] sm:$0xff] %v219
                  %v221 = vld [vmem:[%s197 + $0xb0] sm:$0xff]
                  %222 = vst [vmem:[%s198 + $0x58] sm:$0xff] %v221
                  %v223 = vld [vmem:[%s197 + $0xc0] sm:$0xff]
                  %224 = vst [vmem:[%s198 + $0x60] sm:$0xff] %v223
                  %v225 = vld [vmem:[%s197 + $0xd0] sm:$0xff]
                  %226 = vst [vmem:[%s198 + $0x68] sm:$0xff] %v225
                  %v227 = vld [vmem:[%s197 + $0xe0] sm:$0xff]
                  %228 = vst [vmem:[%s198 + $0x70] sm:$0xff] %v227
                  %v229 = vld [vmem:[%s197 + $0xf0] sm:$0xff]
                  %230 = vst [vmem:[%s198 + $0x78] sm:$0xff] %v229
                  %v231 = vld [vmem:[%s197 + $0x100] sm:$0xff]
                  %232 = vst [vmem:[%s198 + $0x80] sm:$0xff] %v231
                  %v233 = vld [vmem:[%s197 + $0x110] sm:$0xff]
                  %234 = vst [vmem:[%s198 + $0x88] sm:$0xff] %v233
                $region56: #{basic_block_forward.2} parent=50 // loop_footer
                  %s196 = sadd.s32 1, %s192
                $region57: #{basic_block_forward.2} parent=50 // loop_footer_branch
                  %191 = sbr.rel target = $region53
                $region58: #{basic_block_forward.2} parent=50 // loop_exit
                  _
              $region51: #{basic_block_forward.2} parent=35 // pred_fallthru
                _
              // Predicated region
              $region59: #{basic_block_forward.2} parent=35 // pred_check
                _
              $region60: #{basic_block_forward.2} parent=35 // pred_check_branch
                %236 = sbr.rel target = $region62
              $region61: #{basic_block_forward.2} parent=35 // pred_region
                _
              $region62: #{basic_block_forward.2} parent=35 // pred_fallthru
                _
            $region36: #{basic_block_forward.2} parent=31 // pred_fallthru
              _
            // Predicated region
            $region37: #{basic_block_forward.2} parent=31 // pred_check
              _
            $region38: #{basic_block_forward.2} parent=31 // pred_check_branch
              %143 = sbr.rel target = $region40
            $region39: #{basic_block_forward.2} parent=31 // pred_region
              loop: start=0, step=1, limit=1
              $region41: #{basic_block_forward.2} parent=39 // loop_pre_header
                _
              $region42: #{basic_block_forward.2} parent=39 // loop_header
                %s146 = sphi 0, %s150
                %p147 = scmp.ge.s32.totalorder %s146, 1
                %s151 = sphi %s137, %s137
                %s152 = sphi %s134, %s134
              $region43: #{basic_block_forward.2} parent=39 // loop_header_branch
                %149 = sbr.rel (%p147) target = $region47
              $region44: #{basic_block_forward.2} parent=39 // loop_body
                %v153 = vld [vmem:[%s151] sm:$0xff]
                %154 = vst [vmem:[%s152] sm:$0xff] %v153
                %v155 = vld [vmem:[%s151 + $0x10] sm:$0xff]
                %156 = vst [vmem:[%s152 + $0x8] sm:$0xff] %v155
                %v157 = vld [vmem:[%s151 + $0x20] sm:$0xff]
                %158 = vst [vmem:[%s152 + $0x10] sm:$0xff] %v157
                %v159 = vld [vmem:[%s151 + $0x30] sm:$0xff]
                %160 = vst [vmem:[%s152 + $0x18] sm:$0xff] %v159
                %v161 = vld [vmem:[%s151 + $0x40] sm:$0xff]
                %162 = vst [vmem:[%s152 + $0x20] sm:$0xff] %v161
                %v163 = vld [vmem:[%s151 + $0x50] sm:$0xff]
                %164 = vst [vmem:[%s152 + $0x28] sm:$0xff] %v163
                %v165 = vld [vmem:[%s151 + $0x60] sm:$0xff]
                %166 = vst [vmem:[%s152 + $0x30] sm:$0xff] %v165
                %v167 = vld [vmem:[%s151 + $0x70] sm:$0xff]
                %168 = vst [vmem:[%s152 + $0x38] sm:$0xff] %v167
                %v169 = vld [vmem:[%s151 + $0x80] sm:$0xff]
                %170 = vst [vmem:[%s152 + $0x40] sm:$0xff] %v169
                %v171 = vld [vmem:[%s151 + $0x90] sm:$0xff]
                %172 = vst [vmem:[%s152 + $0x48] sm:$0xff] %v171
                %v173 = vld [vmem:[%s151 + $0xa0] sm:$0xff]
                %174 = vst [vmem:[%s152 + $0x50] sm:$0xff] %v173
                %v175 = vld [vmem:[%s151 + $0xb0] sm:$0xff]
                %176 = vst [vmem:[%s152 + $0x58] sm:$0xff] %v175
                %v177 = vld [vmem:[%s151 + $0xc0] sm:$0xff]
                %178 = vst [vmem:[%s152 + $0x60] sm:$0xff] %v177
                %v179 = vld [vmem:[%s151 + $0xd0] sm:$0xff]
                %180 = vst [vmem:[%s152 + $0x68] sm:$0xff] %v179
                %v181 = vld [vmem:[%s151 + $0xe0] sm:$0xff]
                %182 = vst [vmem:[%s152 + $0x70] sm:$0xff] %v181
                %v183 = vld [vmem:[%s151 + $0xf0] sm:$0xff]
                %184 = vst [vmem:[%s152 + $0x78] sm:$0xff] %v183
                %v185 = vld [vmem:[%s151 + $0x100] sm:$0xff]
                %186 = vst [vmem:[%s152 + $0x80] sm:$0xff] %v185
                %v187 = vld [vmem:[%s151 + $0x110] sm:$0xff]
                %188 = vst [vmem:[%s152 + $0x88] sm:$0xff] %v187
              $region45: #{basic_block_forward.2} parent=39 // loop_footer
                %s150 = sadd.s32 1, %s146
              $region46: #{basic_block_forward.2} parent=39 // loop_footer_branch
                %145 = sbr.rel target = $region42
              $region47: #{basic_block_forward.2} parent=39 // loop_exit
                _
            $region40: #{basic_block_forward.2} parent=31 // pred_fallthru
              _
          $region32: #{basic_block_forward.2} parent=27 // pred_fallthru
            _
          %237 = vnop
        $region28: #{basic_block_forward.2} parent=23 // pred_fallthru
          _
      $region24: #{basic_block_forward.2} parent=5 // pred_fallthru
        _
      %p238 = scmp.le.s32.totalorder 1, %s9
      %p239 = scmp.lt.s32.totalorder %s9, 3
      %p240 = pnand %p238, %p239
      %p241 = pneg %p240
      // Predicated region
      $region63: #{basic_block_forward.2} parent=5 // pred_check
        _
      $region64: #{basic_block_forward.2} parent=5 // pred_check_branch
        %243 = sbr.rel (%p240) target = $region66
      $region65: #{basic_block_forward.2} parent=5 // pred_region
        %s244 = ssub.s32 %s9, 1
        %s245 = sand.u32 %s43, 1
        %s246 = sand.u32 %s43, 1
        %s247 = smul.addr %s246, 144
        %s248 = scalar_lea.vmem [#allocation2], %s247
        // Predicated region
        $region67: #{basic_block_forward.2} parent=65 // pred_check
          %p249 = pneg %p56
        $region68: #{basic_block_forward.2} parent=65 // pred_check_branch
          %251 = sbr.rel (%p249) target = $region70
        $region69: #{basic_block_forward.2} parent=65 // pred_region
          _
        $region70: #{basic_block_forward.2} parent=65 // pred_fallthru
          _
        %p252 = pneg %p30
        %p253 = pneg %p27
        %s254 = sand.u32 %s43, 1
        %s255 = sand.u32 %s43, 1
        %s256 = smul.addr %s255, 144
        %s257 = scalar_lea.vmem [#allocation2], %s256
        %p258 = pneg %p56
        %p259 = pneg %p53
        %p260 = pneg %p77
        %p261 = pneg %p74
        %p262 = pneg %p103
        %p263 = pneg %p100
        %s264 = sand.u32 %s90, 1
        %s265 = sand.u32 %s90, 1
        %s266 = smul.addr %s265, 32
        %s267 = scalar_lea.vmem [#allocation3], %s266
        %s268 = smul.u32 2, %s14
        %s269 = smul.u32 2, %s14
        %v271 = vld [vmem:[%s0] sm:$0xff]
        %v272 = vld [vmem:[%s0 + $0x8] sm:$0xff]
        %v273 = vld [vmem:[%s248] sm:$0xff]
        %v274 = vld [vmem:[%s248 + $0x8] sm:$0xff]
        %v275 = vld [vmem:[%s248 + $0x10] sm:$0xff]
        %v276 = vld [vmem:[%s248 + $0x18] sm:$0xff]
        %v277 = vld [vmem:[%s248 + $0x20] sm:$0xff]
        %v278 = vld [vmem:[%s248 + $0x28] sm:$0xff]
        %v279 = vld [vmem:[%s248 + $0x30] sm:$0xff]
        %v280 = vld [vmem:[%s248 + $0x38] sm:$0xff]
        %v281 = vld [vmem:[%s248 + $0x40] sm:$0xff]
        %v282 = vld [vmem:[%s248 + $0x48] sm:$0xff]
        %v283 = vld [vmem:[%s248 + $0x50] sm:$0xff]
        %v284 = vld [vmem:[%s248 + $0x58] sm:$0xff]
        %v285 = vld [vmem:[%s248 + $0x60] sm:$0xff]
        %v286 = vld [vmem:[%s248 + $0x68] sm:$0xff]
        %v287 = vld [vmem:[%s248 + $0x70] sm:$0xff]
        %v288 = vld [vmem:[%s248 + $0x78] sm:$0xff]
        %v289 = vld [vmem:[%s248 + $0x80] sm:$0xff]
        %v290 = vld [vmem:[%s248 + $0x88] sm:$0xff]
        %v291 = vld [vmem:[%s2] sm:$0xff]
        %v292 = vld [vmem:[%s2 + $0x8] sm:$0xff]
        %294 = vset.pattern.permute.xlu0 0
        %295 = vperm.xlu0 %294, %v291
        %v296 = vpop.permute.xlu0 %295
        %299 = vset.pattern.permute.xlu0 0
        %300 = vperm.xlu0 %299, %v292
        %v301 = vpop.permute.xlu0 %300
        %v305 = vunpack.c.l.b16 %v271
        %v306 = vunpack.c.h.b16 %v271
        %v307 = vunpack.c.l.b16 %v272
        %v308 = vunpack.c.h.b16 %v272
        %v309 = vpack.c.b16 %v307, %v305
        %v310 = vpack.c.b16 %v308, %v306
        %v330 = vunpack.c.l.b16 %v273
        %v331 = vunpack.c.h.b16 %v273
        %v332 = vunpack.c.l.b16 %v274
        %v333 = vunpack.c.h.b16 %v274
        %v334 = vunpack.c.l.b16 %v275
        %v335 = vunpack.c.h.b16 %v275
        %v336 = vunpack.c.l.b16 %v276
        %v337 = vunpack.c.h.b16 %v276
        %v338 = vunpack.c.l.b16 %v277
        %v339 = vunpack.c.h.b16 %v277
        %v340 = vunpack.c.l.b16 %v278
        %v341 = vunpack.c.h.b16 %v278
        %v342 = vunpack.c.l.b16 %v279
        %v343 = vunpack.c.h.b16 %v279
        %v344 = vunpack.c.l.b16 %v280
        %v345 = vunpack.c.h.b16 %v280
        %v346 = vunpack.c.l.b16 %v281
        %v347 = vunpack.c.h.b16 %v281
        %v348 = vunpack.c.l.b16 %v282
        %v349 = vunpack.c.h.b16 %v282
        %v350 = vunpack.c.l.b16 %v283
        %v351 = vunpack.c.h.b16 %v283
        %v352 = vunpack.c.l.b16 %v284
        %v353 = vunpack.c.h.b16 %v284
        %v354 = vunpack.c.l.b16 %v285
        %v355 = vunpack.c.h.b16 %v285
        %v356 = vunpack.c.l.b16 %v286
        %v357 = vunpack.c.h.b16 %v286
        %v358 = vunpack.c.l.b16 %v287
        %v359 = vunpack.c.h.b16 %v287
        %v360 = vunpack.c.l.b16 %v288
        %v361 = vunpack.c.h.b16 %v288
        %v362 = vunpack.c.l.b16 %v289
        %v363 = vunpack.c.h.b16 %v289
        %v364 = vunpack.c.l.b16 %v290
        %v365 = vunpack.c.h.b16 %v290
        %v366 = vpack.c.b16 %v332, %v330
        %v367 = vpack.c.b16 %v333, %v331
        %v368 = vpack.c.b16 %v336, %v334
        %v369 = vpack.c.b16 %v337, %v335
        %v370 = vpack.c.b16 %v340, %v338
        %v371 = vpack.c.b16 %v341, %v339
        %v372 = vpack.c.b16 %v344, %v342
        %v373 = vpack.c.b16 %v345, %v343
        %v374 = vpack.c.b16 %v348, %v346
        %v375 = vpack.c.b16 %v349, %v347
        %v376 = vpack.c.b16 %v352, %v350
        %v377 = vpack.c.b16 %v353, %v351
        %v378 = vpack.c.b16 %v356, %v354
        %v379 = vpack.c.b16 %v357, %v355
        %v380 = vpack.c.b16 %v360, %v358
        %v381 = vpack.c.b16 %v361, %v359
        %v382 = vpack.c.b16 %v364, %v362
        %v383 = vpack.c.b16 %v365, %v363
        %vm402 = vcmask 130048
        %v404 = vsel %vm402, %v310, 0
        %406 = vmatprep.subr.bf16.mxu0 %v367
        %407 = vmatpush1.bf16.msra.mxu0 %v366
        %408 = vmatprep.subr.bf16.mxu0 %v369
        %409 = vmatpush1.bf16.msra.mxu0 %v368
        %410 = vmatprep.subr.bf16.mxu0 %v371
        %411 = vmatpush1.bf16.msra.mxu0 %v370
        %412 = vmatprep.subr.bf16.mxu0 %v373
        %413 = vmatpush1.bf16.msra.mxu0 %v372
        %414 = vmatprep.subr.bf16.mxu0 %v375
        %415 = vmatpush1.bf16.msra.mxu0 %v374
        %416 = vmatprep.subr.bf16.mxu0 %v377
        %417 = vmatpush1.bf16.msra.mxu0 %v376
        %418 = vmatprep.subr.bf16.mxu0 %v379
        %419 = vmatpush1.bf16.msra.mxu0 %v378
        %420 = vmatprep.subr.bf16.mxu0 %v381
        %421 = vmatpush1.bf16.msra.mxu0 %v380
        %422 = vmatprep.subr.bf16.mxu0 %v383
        %423 = vmatpush1.bf16.msra.mxu0 %v382
        %424 = vmatprep.subr.bf16.mxu0 0
        %425 = vmatpush1.bf16.msra.mxu0 0
        %426 = vmatprep.subr.bf16.mxu0 0
        %427 = vmatpush1.bf16.msra.mxu0 0
        %428 = vmatprep.subr.bf16.mxu0 0
        %429 = vmatpush1.bf16.msra.mxu0 0
        %430 = vmatprep.subr.bf16.mxu0 0
        %431 = vmatpush1.bf16.msra.mxu0 0
        %432 = vmatprep.subr.bf16.mxu0 0
        %433 = vmatpush1.bf16.msra.mxu0 0
        %434 = vmatprep.subr.bf16.mxu0 0
        %435 = vmatpush1.bf16.msra.mxu0 0
        %436 = vmatprep.subr.bf16.mxu0 0
        %437 = vmatpush1.bf16.msra.mxu0 0
        %438 = vmatprep.mubr.bf16.mxu0 %v404
        %439 = vmatmul.mubr.bf16.gmra.mrb[0].mxu0 %v309
        %v440 = vpop.f32.mrb[0].mxu0
        %v441 = vadd.f32 %v296, %v440
        %v442 = vpop.f32.mrb[0].mxu0
        %v443 = vadd.f32 %v296, %v442
        %v444 = vpop.f32.mrb[0].mxu0
        %v445 = vadd.f32 %v301, %v444
        %v446 = vpop.f32.mrb[0].mxu0
        %v447 = vadd.f32 %v301, %v446
        %448 = vdwg.mxu0
        %v449 = vmax.f32 %v441, 0.0
        %v450 = vmax.f32 %v443, 0.0
        %v451 = vmax.f32 %v445, 0.0
        %v452 = vmax.f32 %v447, 0.0
        %453 = vst [vmem:[%s267] sm:$0xff] %v449
        %454 = vst [vmem:[%s267 + $0x8] sm:$0xff] %v450
        %455 = vst [vmem:[%s267 + $0x10] sm:$0xff] %v451
        %456 = vst [vmem:[%s267 + $0x18] sm:$0xff] %v452
        %s457 = sand.u32 %s90, 1
        %s458 = sand.u32 %s90, 1
        %s459 = smul.addr %s458, 32
        %s460 = scalar_lea.vmem [#allocation3], %s459
        // Predicated region
        $region71: #{basic_block_forward.2} parent=65 // pred_check
          %p461 = pneg %p100
        $region72: #{basic_block_forward.2} parent=65 // pred_check_branch
          %463 = sbr.rel (%p461) target = $region74
        $region73: #{basic_block_forward.2} parent=65 // pred_region
          %s464 = smul.u32 2, %s14
          %s465 = smul.addr %s464, 8
          %s466 = scalar_lea.vmem %s3, %s465
          // Predicated region
          $region75: #{basic_block_forward.2} parent=73 // pred_check
            _
          $region76: #{basic_block_forward.2} parent=73 // pred_check_branch
            %468 = sbr.rel (0) target = $region78
          $region77: #{basic_block_forward.2} parent=73 // pred_region
            // Predicated region
            $region79: #{basic_block_forward.2} parent=77 // pred_check
              _
            $region80: #{basic_block_forward.2} parent=77 // pred_check_branch
              %470 = sbr.rel (0) target = $region82
            $region81: #{basic_block_forward.2} parent=77 // pred_region
              loop: start=0, step=1, limit=1
              $region83: #{basic_block_forward.2} parent=81 // loop_pre_header
                _
              $region84: #{basic_block_forward.2} parent=81 // loop_header
                %s472 = sphi 0, %s476
                %p473 = scmp.ge.s32.totalorder %s472, 1
                %s477 = sphi %s460, %s460
                %s478 = sphi %s466, %s466
              $region85: #{basic_block_forward.2} parent=81 // loop_header_branch
                %475 = sbr.rel (%p473) target = $region89
              $region86: #{basic_block_forward.2} parent=81 // loop_body
                %v479 = vld [vmem:[%s477] sm:$0xff]
                %480 = vst [vmem:[%s478] sm:$0xff] %v479
                %v481 = vld [vmem:[%s477 + $0x8] sm:$0xff]
                %482 = vst [vmem:[%s478 + $0x8] sm:$0xff] %v481
                %v483 = vld [vmem:[%s477 + $0x10] sm:$0xff]
                %484 = vst [vmem:[%s478 + $0x20] sm:$0xff] %v483
                %v485 = vld [vmem:[%s477 + $0x18] sm:$0xff]
                %486 = vst [vmem:[%s478 + $0x28] sm:$0xff] %v485
              $region87: #{basic_block_forward.2} parent=81 // loop_footer
                %s476 = sadd.s32 1, %s472
              $region88: #{basic_block_forward.2} parent=81 // loop_footer_branch
                %471 = sbr.rel target = $region84
              $region89: #{basic_block_forward.2} parent=81 // loop_exit
                _
            $region82: #{basic_block_forward.2} parent=77 // pred_fallthru
              _
            // Predicated region
            $region90: #{basic_block_forward.2} parent=77 // pred_check
              _
            $region91: #{basic_block_forward.2} parent=77 // pred_check_branch
              %488 = sbr.rel target = $region93
            $region92: #{basic_block_forward.2} parent=77 // pred_region
              _
            $region93: #{basic_block_forward.2} parent=77 // pred_fallthru
              _
          $region78: #{basic_block_forward.2} parent=73 // pred_fallthru
            _
          %489 = vnop
        $region74: #{basic_block_forward.2} parent=65 // pred_fallthru
          _
      $region66: #{basic_block_forward.2} parent=5 // pred_fallthru
        _
      %p490 = scmp.le.s32.totalorder 2, %s9
      // Predicated region
      $region94: #{basic_block_forward.2} parent=5 // pred_check
        %p491 = pneg %p490
      $region95: #{basic_block_forward.2} parent=5 // pred_check_branch
        %493 = sbr.rel (%p491) target = $region97
      $region96: #{basic_block_forward.2} parent=5 // pred_region
        %s494 = ssub.s32 %s9, 2
        // Predicated region
        $region98: #{basic_block_forward.2} parent=96 // pred_check
          %p495 = pneg %p106
        $region99: #{basic_block_forward.2} parent=96 // pred_check_branch
          %497 = sbr.rel (%p495) target = $region101
        $region100: #{basic_block_forward.2} parent=96 // pred_region
          %s498 = sand.u32 %s91, 1
          %s499 = sand.u32 %s91, 1
          %s500 = smul.addr %s499, 32
          %s501 = scalar_lea.vmem [#allocation3], %s500
        $region101: #{basic_block_forward.2} parent=96 // pred_fallthru
          _
      $region97: #{basic_block_forward.2} parent=5 // pred_fallthru
        _
    $region6: #{basic_block_forward.2} parent=1 // loop_footer
      %s13 = sadd.s32 1, %s9
    $region7: #{basic_block_forward.2} parent=1 // loop_footer_branch
      %8 = sbr.rel target = $region3
    $region8: #{basic_block_forward.2} parent=1 // loop_exit
      _

// kernel: basic_block_forward.3
$region0: #{basic_block_forward.3}
  #allocation0 [shape = 'u32[]', space=smem, size = 0x4, offset = 0x4, fixed_abs, tag = 'smem constant byte address 0x4 - core index']
  #allocation1 [shape = 'u32[144,128]{1,0:T(1,128)}', space=vmem, size = 0x12000, scoped, tag = 'internal scratch']
  %s0 = inlined_call_operand.vmem [shape: bf16[16,144], index: 0, kind: input, shape index: {}]
  %s1 = inlined_call_operand.vmem [shape: bf16[144,512], index: 1, kind: input, shape index: {}]
  %s2 = inlined_call_operand.vmem [shape: f32[16,1], index: 2, kind: input, shape index: {}]
  %s3 = inlined_call_operand.vmem [shape: f32[16,512], index: 3, kind: input, shape index: {}]
  %s4 = inlined_call_operand.vmem [shape: f32[16,512], index: 4, kind: output, shape index: {}]
  %s5 = sld [smem:[#allocation0]]
  $region129: #{basic_block_forward.3} parent=0
    _
  %s7 = ssub.s32 1, %s5
  %s8 = scalar_select 0, %s7, %s5
  $region1: #{basic_block_forward.3} parent=0
    #allocation2 [shape = 'u8[147456]{0}', space=vmem, size = 0x24000, scoped, tag = 'input window, operand 1']
    #allocation3 [shape = 'u8[32768]{0}', space=vmem, size = 0x8000, scoped, tag = 'input window, operand 3']
    #allocation4 [shape = 'u8[32768]{0}', space=vmem, size = 0x8000, scoped, tag = 'output window, operand 0']
    loop: start=0, step=1, limit=4
    $region2: #{basic_block_forward.3} parent=1 // loop_pre_header
      _
    $region3: #{basic_block_forward.3} parent=1 // loop_header
      %s10 = sphi 0, %s14
      %p11 = scmp.ge.s32.totalorder %s10, 4
      %s18 = sphi 0, %s18
      %s20 = sphi 0, %s18
      %s21 = sphi 0, %s20
      %s35 = sphi 0, %s21
      %s41 = sphi 0, %s43
      %s44 = sphi 0, %s41
      %s45 = sphi 0, %s44
      %s61 = sphi 0, %s45
      %s65 = sphi 0, %s65
      %s67 = sphi 0, %s65
      %s68 = sphi 0, %s67
      %s82 = sphi 0, %s68
      %s88 = sphi 0, %s90
      %s91 = sphi 0, %s88
      %s92 = sphi 0, %s91
      %s108 = sphi 0, %s92
      %s114 = sphi 0, %s116
      %s117 = sphi 0, %s114
      %s118 = sphi 0, %s117
      %s134 = sphi 0, %s118
    $region4: #{basic_block_forward.3} parent=1 // loop_header_branch
      %13 = sbr.rel (%p11) target = $region8
    $region5: #{basic_block_forward.3} parent=1 // loop_body
      %s15 = ssub.s32 %s10, 1
      %s16 = ssub.s32 %s10, 2
      %s17 = sadd.s32 %s10, 1
      %s19 = sadd.s32 %s18, 1
      %p22 = scmp.eq.s32.totalorder %s10, 1
      %p23 = scmp.ne.s32.totalorder %s18, %s20
      %p24 = scmp.eq.s32.totalorder %s10, 0
      %p25 = por %p23, %p24
      %p26 = scmp.ne.s32.totalorder %s18, %s20
      %p27 = scmp.eq.s32.totalorder %s15, 1
      %p28 = por %p26, %p27
      %p29 = scmp.ne.s32.totalorder %s20, %s21
      %p30 = scmp.eq.s32.totalorder %s15, 0
      %p31 = por %p29, %p30
      %p32 = scmp.ne.s32.totalorder %s20, %s21
      %p33 = scmp.eq.s32.totalorder %s16, 1
      %p34 = por %p32, %p33
      %p36 = scmp.ne.s32.totalorder %s21, %s35
      %p37 = scmp.eq.s32.totalorder %s16, 0
      %p38 = por %p36, %p37
      %s39 = ssub.s32 %s10, %s17
      %p40 = scmp.eq.s32.totalorder %s39, 0
      %s42 = sadd.s32 %s41, 1
      %s43 = scalar_select %p40, %s41, %s42
      %p46 = pneg %p40
      %p47 = scmp.eq.s32.totalorder %s10, 1
      %p48 = por %p46, %p47
      %p49 = scmp.ne.s32.totalorder %s41, %s44
      %p50 = scmp.eq.s32.totalorder %s10, 0
      %p51 = por %p49, %p50
      %p52 = scmp.ne.s32.totalorder %s41, %s44
      %p53 = scmp.eq.s32.totalorder %s15, 1
      %p54 = por %p52, %p53
      %p55 = scmp.ne.s32.totalorder %s44, %s45
      %p56 = scmp.eq.s32.totalorder %s15, 0
      %p57 = por %p55, %p56
      %p58 = scmp.ne.s32.totalorder %s44, %s45
      %p59 = scmp.eq.s32.totalorder %s16, 1
      %p60 = por %p58, %p59
      %p62 = scmp.ne.s32.totalorder %s45, %s61
      %p63 = scmp.eq.s32.totalorder %s16, 0
      %p64 = por %p62, %p63
      %s66 = sadd.s32 %s65, 1
      %p69 = scmp.eq.s32.totalorder %s10, 1
      %p70 = scmp.ne.s32.totalorder %s65, %s67
      %p71 = scmp.eq.s32.totalorder %s10, 0
      %p72 = por %p70, %p71
      %p73 = scmp.ne.s32.totalorder %s65, %s67
      %p74 = scmp.eq.s32.totalorder %s15, 1
      %p75 = por %p73, %p74
      %p76 = scmp.ne.s32.totalorder %s67, %s68
      %p77 = scmp.eq.s32.totalorder %s15, 0
      %p78 = por %p76, %p77
      %p79 = scmp.ne.s32.totalorder %s67, %s68
      %p80 = scmp.eq.s32.totalorder %s16, 1
      %p81 = por %p79, %p80
      %p83 = scmp.ne.s32.totalorder %s68, %s82
      %p84 = scmp.eq.s32.totalorder %s16, 0
      %p85 = por %p83, %p84
      %s86 = ssub.s32 %s10, %s17
      %p87 = scmp.eq.s32.totalorder %s86, 0
      %s89 = sadd.s32 %s88, 1
      %s90 = scalar_select %p87, %s88, %s89
      %p93 = pneg %p87
      %p94 = scmp.eq.s32.totalorder %s10, 1
      %p95 = por %p93, %p94
      %p96 = scmp.ne.s32.totalorder %s88, %s91
      %p97 = scmp.eq.s32.totalorder %s10, 0
      %p98 = por %p96, %p97
      %p99 = scmp.ne.s32.totalorder %s88, %s91
      %p100 = scmp.eq.s32.totalorder %s15, 1
      %p101 = por %p99, %p100
      %p102 = scmp.ne.s32.totalorder %s91, %s92
      %p103 = scmp.eq.s32.totalorder %s15, 0
      %p104 = por %p102, %p103
      %p105 = scmp.ne.s32.totalorder %s91, %s92
      %p106 = scmp.eq.s32.totalorder %s16, 1
      %p107 = por %p105, %p106
      %p109 = scmp.ne.s32.totalorder %s92, %s108
      %p110 = scmp.eq.s32.totalorder %s16, 0
      %p111 = por %p109, %p110
      %s112 = ssub.s32 %s10, %s17
      %p113 = scmp.eq.s32.totalorder %s112, 0
      %s115 = sadd.s32 %s114, 1
      %s116 = scalar_select %p113, %s114, %s115
      %p119 = pneg %p113
      %p120 = scmp.eq.s32.totalorder %s10, 1
      %p121 = por %p119, %p120
      %p122 = scmp.ne.s32.totalorder %s114, %s117
      %p123 = scmp.eq.s32.totalorder %s10, 0
      %p124 = por %p122, %p123
      %p125 = scmp.ne.s32.totalorder %s114, %s117
      %p126 = scmp.eq.s32.totalorder %s15, 1
      %p127 = por %p125, %p126
      %p128 = scmp.ne.s32.totalorder %s117, %s118
      %p129 = scmp.eq.s32.totalorder %s15, 0
      %p130 = por %p128, %p129
      %p131 = scmp.ne.s32.totalorder %s117, %s118
      %p132 = scmp.eq.s32.totalorder %s16, 1
      %p133 = por %p131, %p132
      %p135 = scmp.ne.s32.totalorder %s118, %s134
      %p136 = scmp.eq.s32.totalorder %s16, 0
      %p137 = por %p135, %p136
      %p138 = scmp.le.s32.totalorder 1, %s10
      %p139 = scmp.lt.s32.totalorder %s10, 3
      %p140 = pnand %p138, %p139
      %p141 = pneg %p140
      // Predicated region
      $region9: #{basic_block_forward.3} parent=5 // pred_check
        _
      $region10: #{basic_block_forward.3} parent=5 // pred_check_branch
        %143 = sbr.rel (%p140) target = $region12
      $region11: #{basic_block_forward.3} parent=5 // pred_region
        %s144 = ssub.s32 %s10, 1
        // Predicated region
        $region13: #{basic_block_forward.3} parent=11 // pred_check
          %p145 = pneg %p31
        $region14: #{basic_block_forward.3} parent=11 // pred_check_branch
          %147 = sbr.rel (%p145) target = $region16
        $region15: #{basic_block_forward.3} parent=11 // pred_region
          _
        $region16: #{basic_block_forward.3} parent=11 // pred_fallthru
          _
        // Predicated region
        $region17: #{basic_block_forward.3} parent=11 // pred_check
          %p148 = pneg %p78
        $region18: #{basic_block_forward.3} parent=11 // pred_check_branch
          %150 = sbr.rel (%p148) target = $region20
        $region19: #{basic_block_forward.3} parent=11 // pred_region
          _
        $region20: #{basic_block_forward.3} parent=11 // pred_fallthru
          _
      $region12: #{basic_block_forward.3} parent=5 // pred_fallthru
        _
      %p151 = scmp.lt.s32.totalorder %s10, 2
      // Predicated region
      $region21: #{basic_block_forward.3} parent=5 // pred_check
        %p152 = pneg %p151
      $region22: #{basic_block_forward.3} parent=5 // pred_check_branch
        %154 = sbr.rel (%p152) target = $region24
      $region23: #{basic_block_forward.3} parent=5 // pred_region
        // Predicated region
        $region25: #{basic_block_forward.3} parent=23 // pred_check
          %p155 = pneg %p51
        $region26: #{basic_block_forward.3} parent=23 // pred_check_branch
          %157 = sbr.rel (%p155) target = $region28
        $region27: #{basic_block_forward.3} parent=23 // pred_region
          %s158 = sand.u32 %s41, 1
          %s159 = sand.u32 %s41, 1
          %s160 = smul.addr %s159, 144
          %s161 = scalar_lea.vmem [#allocation2], %s160
          %s162 = smul.u32 2, %s10
          %s163 = smul.addr %s162, 4
          %s164 = scalar_lea.vmem %s1, %s163
          // Predicated region
          $region29: #{basic_block_forward.3} parent=27 // pred_check
            _
          $region30: #{basic_block_forward.3} parent=27 // pred_check_branch
            %166 = sbr.rel (0) target = $region32
          $region31: #{basic_block_forward.3} parent=27 // pred_region
            // Predicated region
            $region33: #{basic_block_forward.3} parent=31 // pred_check
              _
            $region34: #{basic_block_forward.3} parent=31 // pred_check_branch
              %168 = sbr.rel (0) target = $region36
            $region35: #{basic_block_forward.3} parent=31 // pred_region
              // Predicated region
              $region48: #{basic_block_forward.3} parent=35 // pred_check
                _
              $region49: #{basic_block_forward.3} parent=35 // pred_check_branch
                %217 = sbr.rel (0) target = $region51
              $region50: #{basic_block_forward.3} parent=35 // pred_region
                loop: start=0, step=1, limit=1
                $region52: #{basic_block_forward.3} parent=50 // loop_pre_header
                  _
                $region53: #{basic_block_forward.3} parent=50 // loop_header
                  %s219 = sphi 0, %s223
                  %p220 = scmp.ge.s32.totalorder %s219, 1
                  %s224 = sphi %s164, %s164
                  %s225 = sphi %s161, %s161
                $region54: #{basic_block_forward.3} parent=50 // loop_header_branch
                  %222 = sbr.rel (%p220) target = $region58
                $region55: #{basic_block_forward.3} parent=50 // loop_body
                  %v226 = vld [vmem:[%s224] sm:$0xff]
                  %227 = vst [vmem:[%s225] sm:$0xff] %v226
                  %v228 = vld [vmem:[%s224 + $0x10] sm:$0xff]
                  %229 = vst [vmem:[%s225 + $0x8] sm:$0xff] %v228
                  %v230 = vld [vmem:[%s224 + $0x20] sm:$0xff]
                  %231 = vst [vmem:[%s225 + $0x10] sm:$0xff] %v230
                  %v232 = vld [vmem:[%s224 + $0x30] sm:$0xff]
                  %233 = vst [vmem:[%s225 + $0x18] sm:$0xff] %v232
                  %v234 = vld [vmem:[%s224 + $0x40] sm:$0xff]
                  %235 = vst [vmem:[%s225 + $0x20] sm:$0xff] %v234
                  %v236 = vld [vmem:[%s224 + $0x50] sm:$0xff]
                  %237 = vst [vmem:[%s225 + $0x28] sm:$0xff] %v236
                  %v238 = vld [vmem:[%s224 + $0x60] sm:$0xff]
                  %239 = vst [vmem:[%s225 + $0x30] sm:$0xff] %v238
                  %v240 = vld [vmem:[%s224 + $0x70] sm:$0xff]
                  %241 = vst [vmem:[%s225 + $0x38] sm:$0xff] %v240
                  %v242 = vld [vmem:[%s224 + $0x80] sm:$0xff]
                  %243 = vst [vmem:[%s225 + $0x40] sm:$0xff] %v242
                  %v244 = vld [vmem:[%s224 + $0x90] sm:$0xff]
                  %245 = vst [vmem:[%s225 + $0x48] sm:$0xff] %v244
                  %v246 = vld [vmem:[%s224 + $0xa0] sm:$0xff]
                  %247 = vst [vmem:[%s225 + $0x50] sm:$0xff] %v246
                  %v248 = vld [vmem:[%s224 + $0xb0] sm:$0xff]
                  %249 = vst [vmem:[%s225 + $0x58] sm:$0xff] %v248
                  %v250 = vld [vmem:[%s224 + $0xc0] sm:$0xff]
                  %251 = vst [vmem:[%s225 + $0x60] sm:$0xff] %v250
                  %v252 = vld [vmem:[%s224 + $0xd0] sm:$0xff]
                  %253 = vst [vmem:[%s225 + $0x68] sm:$0xff] %v252
                  %v254 = vld [vmem:[%s224 + $0xe0] sm:$0xff]
                  %255 = vst [vmem:[%s225 + $0x70] sm:$0xff] %v254
                  %v256 = vld [vmem:[%s224 + $0xf0] sm:$0xff]
                  %257 = vst [vmem:[%s225 + $0x78] sm:$0xff] %v256
                  %v258 = vld [vmem:[%s224 + $0x100] sm:$0xff]
                  %259 = vst [vmem:[%s225 + $0x80] sm:$0xff] %v258
                  %v260 = vld [vmem:[%s224 + $0x110] sm:$0xff]
                  %261 = vst [vmem:[%s225 + $0x88] sm:$0xff] %v260
                $region56: #{basic_block_forward.3} parent=50 // loop_footer
                  %s223 = sadd.s32 1, %s219
                $region57: #{basic_block_forward.3} parent=50 // loop_footer_branch
                  %218 = sbr.rel target = $region53
                $region58: #{basic_block_forward.3} parent=50 // loop_exit
                  _
              $region51: #{basic_block_forward.3} parent=35 // pred_fallthru
                _
              // Predicated region
              $region59: #{basic_block_forward.3} parent=35 // pred_check
                _
              $region60: #{basic_block_forward.3} parent=35 // pred_check_branch
                %263 = sbr.rel target = $region62
              $region61: #{basic_block_forward.3} parent=35 // pred_region
                _
              $region62: #{basic_block_forward.3} parent=35 // pred_fallthru
                _
            $region36: #{basic_block_forward.3} parent=31 // pred_fallthru
              _
            // Predicated region
            $region37: #{basic_block_forward.3} parent=31 // pred_check
              _
            $region38: #{basic_block_forward.3} parent=31 // pred_check_branch
              %170 = sbr.rel target = $region40
            $region39: #{basic_block_forward.3} parent=31 // pred_region
              loop: start=0, step=1, limit=1
              $region41: #{basic_block_forward.3} parent=39 // loop_pre_header
                _
              $region42: #{basic_block_forward.3} parent=39 // loop_header
                %s173 = sphi 0, %s177
                %p174 = scmp.ge.s32.totalorder %s173, 1
                %s178 = sphi %s164, %s164
                %s179 = sphi %s161, %s161
              $region43: #{basic_block_forward.3} parent=39 // loop_header_branch
                %176 = sbr.rel (%p174) target = $region47
              $region44: #{basic_block_forward.3} parent=39 // loop_body
                %v180 = vld [vmem:[%s178] sm:$0xff]
                %181 = vst [vmem:[%s179] sm:$0xff] %v180
                %v182 = vld [vmem:[%s178 + $0x10] sm:$0xff]
                %183 = vst [vmem:[%s179 + $0x8] sm:$0xff] %v182
                %v184 = vld [vmem:[%s178 + $0x20] sm:$0xff]
                %185 = vst [vmem:[%s179 + $0x10] sm:$0xff] %v184
                %v186 = vld [vmem:[%s178 + $0x30] sm:$0xff]
                %187 = vst [vmem:[%s179 + $0x18] sm:$0xff] %v186
                %v188 = vld [vmem:[%s178 + $0x40] sm:$0xff]
                %189 = vst [vmem:[%s179 + $0x20] sm:$0xff] %v188
                %v190 = vld [vmem:[%s178 + $0x50] sm:$0xff]
                %191 = vst [vmem:[%s179 + $0x28] sm:$0xff] %v190
                %v192 = vld [vmem:[%s178 + $0x60] sm:$0xff]
                %193 = vst [vmem:[%s179 + $0x30] sm:$0xff] %v192
                %v194 = vld [vmem:[%s178 + $0x70] sm:$0xff]
                %195 = vst [vmem:[%s179 + $0x38] sm:$0xff] %v194
                %v196 = vld [vmem:[%s178 + $0x80] sm:$0xff]
                %197 = vst [vmem:[%s179 + $0x40] sm:$0xff] %v196
                %v198 = vld [vmem:[%s178 + $0x90] sm:$0xff]
                %199 = vst [vmem:[%s179 + $0x48] sm:$0xff] %v198
                %v200 = vld [vmem:[%s178 + $0xa0] sm:$0xff]
                %201 = vst [vmem:[%s179 + $0x50] sm:$0xff] %v200
                %v202 = vld [vmem:[%s178 + $0xb0] sm:$0xff]
                %203 = vst [vmem:[%s179 + $0x58] sm:$0xff] %v202
                %v204 = vld [vmem:[%s178 + $0xc0] sm:$0xff]
                %205 = vst [vmem:[%s179 + $0x60] sm:$0xff] %v204
                %v206 = vld [vmem:[%s178 + $0xd0] sm:$0xff]
                %207 = vst [vmem:[%s179 + $0x68] sm:$0xff] %v206
                %v208 = vld [vmem:[%s178 + $0xe0] sm:$0xff]
                %209 = vst [vmem:[%s179 + $0x70] sm:$0xff] %v208
                %v210 = vld [vmem:[%s178 + $0xf0] sm:$0xff]
                %211 = vst [vmem:[%s179 + $0x78] sm:$0xff] %v210
                %v212 = vld [vmem:[%s178 + $0x100] sm:$0xff]
                %213 = vst [vmem:[%s179 + $0x80] sm:$0xff] %v212
                %v214 = vld [vmem:[%s178 + $0x110] sm:$0xff]
                %215 = vst [vmem:[%s179 + $0x88] sm:$0xff] %v214
              $region45: #{basic_block_forward.3} parent=39 // loop_footer
                %s177 = sadd.s32 1, %s173
              $region46: #{basic_block_forward.3} parent=39 // loop_footer_branch
                %172 = sbr.rel target = $region42
              $region47: #{basic_block_forward.3} parent=39 // loop_exit
                _
            $region40: #{basic_block_forward.3} parent=31 // pred_fallthru
              _
          $region32: #{basic_block_forward.3} parent=27 // pred_fallthru
            _
          %264 = vnop
        $region28: #{basic_block_forward.3} parent=23 // pred_fallthru
          _
        // Predicated region
        $region63: #{basic_block_forward.3} parent=23 // pred_check
          %p265 = pneg %p98
        $region64: #{basic_block_forward.3} parent=23 // pred_check_branch
          %267 = sbr.rel (%p265) target = $region66
        $region65: #{basic_block_forward.3} parent=23 // pred_region
          %s268 = sand.u32 %s88, 1
          %s269 = sand.u32 %s88, 1
          %s270 = smul.addr %s269, 32
          %s271 = scalar_lea.vmem [#allocation3], %s270
          %s272 = smul.u32 2, %s10
          %s273 = smul.addr %s272, 8
          %s274 = scalar_lea.vmem %s3, %s273
          // Predicated region
          $region67: #{basic_block_forward.3} parent=65 // pred_check
            _
          $region68: #{basic_block_forward.3} parent=65 // pred_check_branch
            %276 = sbr.rel (0) target = $region70
          $region69: #{basic_block_forward.3} parent=65 // pred_region
            // Predicated region
            $region71: #{basic_block_forward.3} parent=69 // pred_check
              _
            $region72: #{basic_block_forward.3} parent=69 // pred_check_branch
              %278 = sbr.rel (0) target = $region74
            $region73: #{basic_block_forward.3} parent=69 // pred_region
              loop: start=0, step=1, limit=1
              $region75: #{basic_block_forward.3} parent=73 // loop_pre_header
                _
              $region76: #{basic_block_forward.3} parent=73 // loop_header
                %s280 = sphi 0, %s284
                %p281 = scmp.ge.s32.totalorder %s280, 1
                %s285 = sphi %s274, %s274
                %s286 = sphi %s271, %s271
              $region77: #{basic_block_forward.3} parent=73 // loop_header_branch
                %283 = sbr.rel (%p281) target = $region81
              $region78: #{basic_block_forward.3} parent=73 // loop_body
                %v287 = vld [vmem:[%s285] sm:$0xff]
                %288 = vst [vmem:[%s286] sm:$0xff] %v287
                %v289 = vld [vmem:[%s285 + $0x8] sm:$0xff]
                %290 = vst [vmem:[%s286 + $0x8] sm:$0xff] %v289
                %v291 = vld [vmem:[%s285 + $0x20] sm:$0xff]
                %292 = vst [vmem:[%s286 + $0x10] sm:$0xff] %v291
                %v293 = vld [vmem:[%s285 + $0x28] sm:$0xff]
                %294 = vst [vmem:[%s286 + $0x18] sm:$0xff] %v293
              $region79: #{basic_block_forward.3} parent=73 // loop_footer
                %s284 = sadd.s32 1, %s280
              $region80: #{basic_block_forward.3} parent=73 // loop_footer_branch
                %279 = sbr.rel target = $region76
              $region81: #{basic_block_forward.3} parent=73 // loop_exit
                _
            $region74: #{basic_block_forward.3} parent=69 // pred_fallthru
              _
            // Predicated region
            $region82: #{basic_block_forward.3} parent=69 // pred_check
              _
            $region83: #{basic_block_forward.3} parent=69 // pred_check_branch
              %296 = sbr.rel target = $region85
            $region84: #{basic_block_forward.3} parent=69 // pred_region
              _
            $region85: #{basic_block_forward.3} parent=69 // pred_fallthru
              _
          $region70: #{basic_block_forward.3} parent=65 // pred_fallthru
            _
          %297 = vnop
        $region66: #{basic_block_forward.3} parent=23 // pred_fallthru
          _
      $region24: #{basic_block_forward.3} parent=5 // pred_fallthru
        _
      %p298 = scmp.le.s32.totalorder 1, %s10
      %p299 = scmp.lt.s32.totalorder %s10, 3
      %p300 = pnand %p298, %p299
      %p301 = pneg %p300
      // Predicated region
      $region86: #{basic_block_forward.3} parent=5 // pred_check
        _
      $region87: #{basic_block_forward.3} parent=5 // pred_check_branch
        %303 = sbr.rel (%p300) target = $region89
      $region88: #{basic_block_forward.3} parent=5 // pred_region
        %s304 = ssub.s32 %s10, 1
        %s305 = sand.u32 %s44, 1
        %s306 = sand.u32 %s44, 1
        %s307 = smul.addr %s306, 144
        %s308 = scalar_lea.vmem [#allocation2], %s307
        // Predicated region
        $region90: #{basic_block_forward.3} parent=88 // pred_check
          %p309 = pneg %p57
        $region91: #{basic_block_forward.3} parent=88 // pred_check_branch
          %311 = sbr.rel (%p309) target = $region93
        $region92: #{basic_block_forward.3} parent=88 // pred_region
          _
        $region93: #{basic_block_forward.3} parent=88 // pred_fallthru
          _
        %s312 = sand.u32 %s91, 1
        %s313 = sand.u32 %s91, 1
        %s314 = smul.addr %s313, 32
        %s315 = scalar_lea.vmem [#allocation3], %s314
        // Predicated region
        $region94: #{basic_block_forward.3} parent=88 // pred_check
          %p316 = pneg %p104
        $region95: #{basic_block_forward.3} parent=88 // pred_check_branch
          %318 = sbr.rel (%p316) target = $region97
        $region96: #{basic_block_forward.3} parent=88 // pred_region
          _
        $region97: #{basic_block_forward.3} parent=88 // pred_fallthru
          _
        %p319 = pneg %p31
        %p320 = pneg %p28
        %s321 = sand.u32 %s44, 1
        %s322 = sand.u32 %s44, 1
        %s323 = smul.addr %s322, 144
        %s324 = scalar_lea.vmem [#allocation2], %s323
        %p325 = pneg %p57
        %p326 = pneg %p54
        %p327 = pneg %p78
        %p328 = pneg %p75
        %s329 = sand.u32 %s91, 1
        %s330 = sand.u32 %s91, 1
        %s331 = smul.addr %s330, 32
        %s332 = scalar_lea.vmem [#allocation3], %s331
        %p333 = pneg %p104
        %p334 = pneg %p101
        %p335 = pneg %p130
        %p336 = pneg %p127
        %s337 = sand.u32 %s117, 1
        %s338 = sand.u32 %s117, 1
        %s339 = smul.addr %s338, 32
        %s340 = scalar_lea.vmem [#allocation4], %s339
        %s341 = smul.u32 2, %s15
        %s342 = smul.u32 2, %s15
        %s343 = smul.u32 2, %s15
        %v345 = vld [vmem:[%s0] sm:$0xff]
        %v346 = vld [vmem:[%s0 + $0x8] sm:$0xff]
        %v347 = vld [vmem:[%s308] sm:$0xff]
        %v348 = vld [vmem:[%s308 + $0x8] sm:$0xff]
        %v349 = vld [vmem:[%s308 + $0x10] sm:$0xff]
        %v350 = vld [vmem:[%s308 + $0x18] sm:$0xff]
        %v351 = vld [vmem:[%s308 + $0x20] sm:$0xff]
        %v352 = vld [vmem:[%s308 + $0x28] sm:$0xff]
        %v353 = vld [vmem:[%s308 + $0x30] sm:$0xff]
        %v354 = vld [vmem:[%s308 + $0x38] sm:$0xff]
        %v355 = vld [vmem:[%s308 + $0x40] sm:$0xff]
        %v356 = vld [vmem:[%s308 + $0x48] sm:$0xff]
        %v357 = vld [vmem:[%s308 + $0x50] sm:$0xff]
        %v358 = vld [vmem:[%s308 + $0x58] sm:$0xff]
        %v359 = vld [vmem:[%s308 + $0x60] sm:$0xff]
        %v360 = vld [vmem:[%s308 + $0x68] sm:$0xff]
        %v361 = vld [vmem:[%s308 + $0x70] sm:$0xff]
        %v362 = vld [vmem:[%s308 + $0x78] sm:$0xff]
        %v363 = vld [vmem:[%s308 + $0x80] sm:$0xff]
        %v364 = vld [vmem:[%s308 + $0x88] sm:$0xff]
        %v365 = vld [vmem:[%s2] sm:$0xff]
        %v366 = vld [vmem:[%s2 + $0x8] sm:$0xff]
        %368 = vset.pattern.permute.xlu0 0
        %369 = vperm.xlu0 %368, %v365
        %v370 = vpop.permute.xlu0 %369
        %373 = vset.pattern.permute.xlu0 0
        %374 = vperm.xlu0 %373, %v366
        %v375 = vpop.permute.xlu0 %374
        %v379 = vunpack.c.l.b16 %v345
        %v380 = vunpack.c.h.b16 %v345
        %v381 = vunpack.c.l.b16 %v346
        %v382 = vunpack.c.h.b16 %v346
        %v383 = vpack.c.b16 %v381, %v379
        %v384 = vpack.c.b16 %v382, %v380
        %v404 = vunpack.c.l.b16 %v347
        %v405 = vunpack.c.h.b16 %v347
        %v406 = vunpack.c.l.b16 %v348
        %v407 = vunpack.c.h.b16 %v348
        %v408 = vunpack.c.l.b16 %v349
        %v409 = vunpack.c.h.b16 %v349
        %v410 = vunpack.c.l.b16 %v350
        %v411 = vunpack.c.h.b16 %v350
        %v412 = vunpack.c.l.b16 %v351
        %v413 = vunpack.c.h.b16 %v351
        %v414 = vunpack.c.l.b16 %v352
        %v415 = vunpack.c.h.b16 %v352
        %v416 = vunpack.c.l.b16 %v353
        %v417 = vunpack.c.h.b16 %v353
        %v418 = vunpack.c.l.b16 %v354
        %v419 = vunpack.c.h.b16 %v354
        %v420 = vunpack.c.l.b16 %v355
        %v421 = vunpack.c.h.b16 %v355
        %v422 = vunpack.c.l.b16 %v356
        %v423 = vunpack.c.h.b16 %v356
        %v424 = vunpack.c.l.b16 %v357
        %v425 = vunpack.c.h.b16 %v357
        %v426 = vunpack.c.l.b16 %v358
        %v427 = vunpack.c.h.b16 %v358
        %v428 = vunpack.c.l.b16 %v359
        %v429 = vunpack.c.h.b16 %v359
        %v430 = vunpack.c.l.b16 %v360
        %v431 = vunpack.c.h.b16 %v360
        %v432 = vunpack.c.l.b16 %v361
        %v433 = vunpack.c.h.b16 %v361
        %v434 = vunpack.c.l.b16 %v362
        %v435 = vunpack.c.h.b16 %v362
        %v436 = vunpack.c.l.b16 %v363
        %v437 = vunpack.c.h.b16 %v363
        %v438 = vunpack.c.l.b16 %v364
        %v439 = vunpack.c.h.b16 %v364
        %v440 = vpack.c.b16 %v406, %v404
        %v441 = vpack.c.b16 %v407, %v405
        %v442 = vpack.c.b16 %v410, %v408
        %v443 = vpack.c.b16 %v411, %v409
        %v444 = vpack.c.b16 %v414, %v412
        %v445 = vpack.c.b16 %v415, %v413
        %v446 = vpack.c.b16 %v418, %v416
        %v447 = vpack.c.b16 %v419, %v417
        %v448 = vpack.c.b16 %v422, %v420
        %v449 = vpack.c.b16 %v423, %v421
        %v450 = vpack.c.b16 %v426, %v424
        %v451 = vpack.c.b16 %v427, %v425
        %v452 = vpack.c.b16 %v430, %v428
        %v453 = vpack.c.b16 %v431, %v429
        %v454 = vpack.c.b16 %v434, %v432
        %v455 = vpack.c.b16 %v435, %v433
        %v456 = vpack.c.b16 %v438, %v436
        %v457 = vpack.c.b16 %v439, %v437
        %vm476 = vcmask 130048
        %v478 = vsel %vm476, %v384, 0
        %480 = vmatprep.subr.bf16.mxu0 %v441
        %481 = vmatpush1.bf16.msra.mxu0 %v440
        %482 = vmatprep.subr.bf16.mxu0 %v443
        %483 = vmatpush1.bf16.msra.mxu0 %v442
        %484 = vmatprep.subr.bf16.mxu0 %v445
        %485 = vmatpush1.bf16.msra.mxu0 %v444
        %486 = vmatprep.subr.bf16.mxu0 %v447
        %487 = vmatpush1.bf16.msra.mxu0 %v446
        %488 = vmatprep.subr.bf16.mxu0 %v449
        %489 = vmatpush1.bf16.msra.mxu0 %v448
        %490 = vmatprep.subr.bf16.mxu0 %v451
        %491 = vmatpush1.bf16.msra.mxu0 %v450
        %492 = vmatprep.subr.bf16.mxu0 %v453
        %493 = vmatpush1.bf16.msra.mxu0 %v452
        %494 = vmatprep.subr.bf16.mxu0 %v455
        %495 = vmatpush1.bf16.msra.mxu0 %v454
        %496 = vmatprep.subr.bf16.mxu0 %v457
        %497 = vmatpush1.bf16.msra.mxu0 %v456
        %498 = vmatprep.subr.bf16.mxu0 0
        %499 = vmatpush1.bf16.msra.mxu0 0
        %500 = vmatprep.subr.bf16.mxu0 0
        %501 = vmatpush1.bf16.msra.mxu0 0
        %502 = vmatprep.subr.bf16.mxu0 0
        %503 = vmatpush1.bf16.msra.mxu0 0
        %504 = vmatprep.subr.bf16.mxu0 0
        %505 = vmatpush1.bf16.msra.mxu0 0
        %506 = vmatprep.subr.bf16.mxu0 0
        %507 = vmatpush1.bf16.msra.mxu0 0
        %508 = vmatprep.subr.bf16.mxu0 0
        %509 = vmatpush1.bf16.msra.mxu0 0
        %510 = vmatprep.subr.bf16.mxu0 0
        %511 = vmatpush1.bf16.msra.mxu0 0
        %512 = vmatprep.mubr.bf16.mxu0 %v478
        %513 = vmatmul.mubr.bf16.gmra.mrb[0].mxu0 %v383
        %v514 = vpop.f32.mrb[0].mxu0
        %v515 = vadd.f32 %v370, %v514
        %v516 = vpop.f32.mrb[0].mxu0
        %v517 = vadd.f32 %v370, %v516
        %v518 = vpop.f32.mrb[0].mxu0
        %v519 = vadd.f32 %v375, %v518
        %v520 = vpop.f32.mrb[0].mxu0
        %v521 = vadd.f32 %v375, %v520
        %522 = vdwg.mxu0
        %v523 = vld [vmem:[%s315] sm:$0xff]
        %v524 = vld [vmem:[%s315 + $0x8] sm:$0xff]
        %v525 = vld [vmem:[%s315 + $0x10] sm:$0xff]
        %v526 = vld [vmem:[%s315 + $0x18] sm:$0xff]
        %v527 = vadd.f32 %v515, %v523
        %v528 = vadd.f32 %v517, %v524
        %v529 = vadd.f32 %v519, %v525
        %v530 = vadd.f32 %v521, %v526
        %v531 = vmax.f32 %v527, 0.0
        %v532 = vmax.f32 %v528, 0.0
        %v533 = vmax.f32 %v529, 0.0
        %v534 = vmax.f32 %v530, 0.0
        %535 = vst [vmem:[%s340] sm:$0xff] %v531
        %536 = vst [vmem:[%s340 + $0x8] sm:$0xff] %v532
        %537 = vst [vmem:[%s340 + $0x10] sm:$0xff] %v533
        %538 = vst [vmem:[%s340 + $0x18] sm:$0xff] %v534
        %s539 = sand.u32 %s117, 1
        %s540 = sand.u32 %s117, 1
        %s541 = smul.addr %s540, 32
        %s542 = scalar_lea.vmem [#allocation4], %s541
        // Predicated region
        $region98: #{basic_block_forward.3} parent=88 // pred_check
          %p543 = pneg %p127
        $region99: #{basic_block_forward.3} parent=88 // pred_check_branch
          %545 = sbr.rel (%p543) target = $region101
        $region100: #{basic_block_forward.3} parent=88 // pred_region
          %s546 = smul.u32 2, %s15
          %s547 = smul.addr %s546, 8
          %s548 = scalar_lea.vmem %s4, %s547
          // Predicated region
          $region102: #{basic_block_forward.3} parent=100 // pred_check
            _
          $region103: #{basic_block_forward.3} parent=100 // pred_check_branch
            %550 = sbr.rel (0) target = $region105
          $region104: #{basic_block_forward.3} parent=100 // pred_region
            // Predicated region
            $region106: #{basic_block_forward.3} parent=104 // pred_check
              _
            $region107: #{basic_block_forward.3} parent=104 // pred_check_branch
              %552 = sbr.rel (0) target = $region109
            $region108: #{basic_block_forward.3} parent=104 // pred_region
              loop: start=0, step=1, limit=1
              $region110: #{basic_block_forward.3} parent=108 // loop_pre_header
                _
              $region111: #{basic_block_forward.3} parent=108 // loop_header
                %s554 = sphi 0, %s558
                %p555 = scmp.ge.s32.totalorder %s554, 1
                %s559 = sphi %s542, %s542
                %s560 = sphi %s548, %s548
              $region112: #{basic_block_forward.3} parent=108 // loop_header_branch
                %557 = sbr.rel (%p555) target = $region116
              $region113: #{basic_block_forward.3} parent=108 // loop_body
                %v561 = vld [vmem:[%s559] sm:$0xff]
                %562 = vst [vmem:[%s560] sm:$0xff] %v561
                %v563 = vld [vmem:[%s559 + $0x8] sm:$0xff]
                %564 = vst [vmem:[%s560 + $0x8] sm:$0xff] %v563
                %v565 = vld [vmem:[%s559 + $0x10] sm:$0xff]
                %566 = vst [vmem:[%s560 + $0x20] sm:$0xff] %v565
                %v567 = vld [vmem:[%s559 + $0x18] sm:$0xff]
                %568 = vst [vmem:[%s560 + $0x28] sm:$0xff] %v567
              $region114: #{basic_block_forward.3} parent=108 // loop_footer
                %s558 = sadd.s32 1, %s554
              $region115: #{basic_block_forward.3} parent=108 // loop_footer_branch
                %553 = sbr.rel target = $region111
              $region116: #{basic_block_forward.3} parent=108 // loop_exit
                _
            $region109: #{basic_block_forward.3} parent=104 // pred_fallthru
              _
            // Predicated region
            $region117: #{basic_block_forward.3} parent=104 // pred_check
              _
            $region118: #{basic_block_forward.3} parent=104 // pred_check_branch
              %570 = sbr.rel target = $region120
            $region119: #{basic_block_forward.3} parent=104 // pred_region
              _
            $region120: #{basic_block_forward.3} parent=104 // pred_fallthru
              _
          $region105: #{basic_block_forward.3} parent=100 // pred_fallthru
            _
          %571 = vnop
        $region101: #{basic_block_forward.3} parent=88 // pred_fallthru
          _
      $region89: #{basic_block_forward.3} parent=5 // pred_fallthru
        _
      %p572 = scmp.le.s32.totalorder 2, %s10
      // Predicated region
      $region121: #{basic_block_forward.3} parent=5 // pred_check
        %p573 = pneg %p572
      $region122: #{basic_block_forward.3} parent=5 // pred_check_branch
        %575 = sbr.rel (%p573) target = $region124
      $region123: #{basic_block_forward.3} parent=5 // pred_region
        %s576 = ssub.s32 %s10, 2
        // Predicated region
        $region125: #{basic_block_forward.3} parent=123 // pred_check
          %p577 = pneg %p133
        $region126: #{basic_block_forward.3} parent=123 // pred_check_branch
          %579 = sbr.rel (%p577) target = $region128
        $region127: #{basic_block_forward.3} parent=123 // pred_region
          %s580 = sand.u32 %s118, 1
          %s581 = sand.u32 %s118, 1
          %s582 = smul.addr %s581, 32
          %s583 = scalar_lea.vmem [#allocation4], %s582
        $region128: #{basic_block_forward.3} parent=123 // pred_fallthru
          _
      $region124: #{basic_block_forward.3} parent=5 // pred_fallthru
        _
    $region6: #{basic_block_forward.3} parent=1 // loop_footer
      %s14 = sadd.s32 1, %s10
    $region7: #{basic_block_forward.3} parent=1 // loop_footer_branch
      %9 = sbr.rel target = $region3
    $region8: #{basic_block_forward.3} parent=1 // loop_exit
      _

</llo_original>
